<compile_context>
chip_gen: v7x
topology: tpu7x:2x2x1
jax: 0.10.0
libtpu: 0.0.40
codegen_flags: <defaults>
</compile_context>

<pallas_src>
import functools
import math

import jax
import jax.numpy as jnp
from jax.experimental import pallas as pl
from jax.experimental.pallas import tpu as pltpu


def _leaky_relu(v, slope=0.01):
    # nn.LeakyReLU default negative_slope = 0.01
    return jnp.where(v >= 0, v, slope * v)


def _round_up(a, b):
    return (a + b - 1) // b * b


def make_netclassif_kernel(F, E, Wp, l1, l5):
    """Build the kernel closure over the static layout constants.

    Slab layouts (all offsets sublane-aligned: 8 rows for f32, 16 for bf16):
      phi_w (f32, width Wp):   W1 @ [0:l1), W2 @ [l1:l1+Wp), W3 @ [+Wp), W4 @ [+Wp)
      phi_b (f32, width Wp):   b1 @ row 0, b2 @ 8, b3 @ 16, b4 @ 24
      psi_w (bf16, width 128): W5 @ [0:l5), W6 @ [l5:+128), W7 @ [+128), W8 @ [+128)
      psi_b (f32, width 128):  b5 @ row 0, b6 @ 8, b7 @ 16, b8 @ 24
    All padding rows/cols are zeros, chosen so padded-width matmuls are exact.
    """
    o2 = l1
    o3 = o2 + Wp
    o4 = o3 + Wp
    p2 = l5
    p3 = p2 + 128
    p4 = p3 + 128
    f32 = jnp.float32
    bf16 = jnp.bfloat16

    def kernel(in_ref, pw_ref, pb_ref, qw_ref, qb_ref, out_ref):
        x = in_ref[:, :F - 1]            # (tm, F-1) covariates, f32
        t = in_ref[:, F - 1:F]           # (tm, 1)   treatment,  f32 (exact)

        # ---- phi MLP (f32 end-to-end; phi_t is a returned output):
        #   Linear(F-1,32)+LeakyReLU -> Linear(32,32)+ReLU
        #   -> Linear(32,28)+LeakyReLU -> Linear(28,E)
        h = _leaky_relu(
            jnp.dot(x, pw_ref[0:F - 1, :], preferred_element_type=f32)
            + pb_ref[0:1, :])
        h = jnp.maximum(
            jnp.dot(h, pw_ref[o2:o2 + Wp, :], preferred_element_type=f32)
            + pb_ref[8:9, :], 0.0)
        h = _leaky_relu(
            jnp.dot(h, pw_ref[o3:o3 + Wp, :], preferred_element_type=f32)
            + pb_ref[16:17, :])
        phi_pad = (jnp.dot(h, pw_ref[o4:o4 + Wp, :], preferred_element_type=f32)
                   + pb_ref[24:25, :])
        phi = phi_pad[:, :E]             # (tm, E) f32, exact

        phi_t = jnp.concatenate([phi, t], axis=-1)          # (tm, E+1)

        # ---- psi MLP on phi_t (bf16 MXU inputs, f32 accumulate + epilogue):
        #   Linear(E+1,128)+LeakyReLU -> Linear(128,128)+LeakyReLU
        #   -> Linear(128,50)+ReLU -> Linear(50,1) -> Sigmoid
        pad_cols = l5 - (E + 1)
        if pad_cols > 0:
            z = jnp.zeros((phi_t.shape[0], pad_cols), f32)
            psi_in = jnp.concatenate([phi_t, z], axis=-1)   # (tm, l5)
        else:
            psi_in = phi_t
        g = _leaky_relu(
            jnp.dot(psi_in.astype(bf16), qw_ref[0:l5, :],
                    preferred_element_type=f32) + qb_ref[0:1, :])
        g = _leaky_relu(
            jnp.dot(g.astype(bf16), qw_ref[p2:p2 + 128, :],
                    preferred_element_type=f32) + qb_ref[8:9, :])
        g = jnp.maximum(
            jnp.dot(g.astype(bf16), qw_ref[p3:p3 + 128, :],
                    preferred_element_type=f32) + qb_ref[16:17, :], 0.0)
        logit = (jnp.dot(g.astype(bf16), qw_ref[p4:p4 + 128, :],
                         preferred_element_type=f32) + qb_ref[24:25, :])
        sigma = jax.nn.sigmoid(logit[:, 0:1])               # (tm, 1)

        # ---- single fused store: [phi, t, sigma]
        out_ref[...] = jnp.concatenate([phi_t, sigma], axis=-1)

    return kernel


def init_params(key, in_features, encoded_features):
    """Deterministic PyTorch-style Linear init (U(-1/sqrt(fan_in), +)).

    Weights are stored transposed as (fan_in, fan_out); biases as (1, fan_out).
    """
    dims = [
        # phi
        (in_features - 1, 32), (32, 32), (32, 28), (28, encoded_features),
        # psi
        (encoded_features + 1, 128), (128, 128), (128, 50), (50, 1),
    ]
    flat = []
    for (fan_in, fan_out) in dims:
        key, kw, kb = jax.random.split(key, 3)
        bound = 1.0 / math.sqrt(fan_in)
        W = jax.random.uniform(kw, (fan_in, fan_out), jnp.float32, -bound, bound)
        b = jax.random.uniform(kb, (1, fan_out), jnp.float32, -bound, bound)
        flat += [W, b]
    return flat


@functools.partial(jax.jit, static_argnames=("encoded_features", "tile_m"))
def netclassif_forward(inp, params_flat, encoded_features, tile_m=2048):
    N, F = inp.shape
    E = encoded_features

    (w1, b1, w2, b2, w3, b3, w4, b4,
     w5, b5, w6, b6, w7, b7, w8, b8) = params_flat

    f32 = jnp.float32
    bf16 = jnp.bfloat16

    # Static slab layout constants.
    Wp = _round_up(max(32, E), 8)      # padded width of the phi stack
    l1 = _round_up(F - 1, 8)           # padded row count of W1
    l5 = _round_up(E + 1, 16)          # padded row count of W5 (bf16 slab)

    def pad2(a, rows, cols):
        return jnp.pad(a, ((0, rows - a.shape[0]), (0, cols - a.shape[1])))

    # phi weights: f32 slab, zero-padded so padded-width matmuls are exact.
    phi_w = jnp.concatenate([
        pad2(w1.astype(f32), l1, Wp),
        pad2(w2.astype(f32), Wp, Wp),
        pad2(w3.astype(f32), Wp, Wp),
        pad2(w4.astype(f32), Wp, Wp),
    ], axis=0)                                            # (l1 + 3*Wp, Wp)

    # psi weights: bf16 slab for the MXU (f32 accumulation in-kernel).
    psi_w = jnp.concatenate([
        pad2(w5.astype(bf16), l5, 128),
        pad2(w6.astype(bf16), 128, 128),
        pad2(w7.astype(bf16), 128, 128),
        pad2(w8.astype(bf16), 128, 128),
    ], axis=0)                                            # (l5 + 384, 128)

    def bias_slab(bs, width):
        rows = [pad2(b.reshape(1, -1).astype(f32), 8, width) for b in bs]
        return jnp.concatenate(rows, axis=0)              # (32, width) f32

    phi_b = bias_slab([b1, b2, b3, b4], Wp)
    psi_b = bias_slab([b5, b6, b7, b8], 128)

    # Row tiling: keep >=4 grid steps when N allows (v7x megacore + pipelining),
    # cap at tile_m; no host-side padding — Pallas masks the ragged last block.
    tm = max(8, min(tile_m, _round_up(pl.cdiv(N, 4), 8)))
    grid = (pl.cdiv(N, tm),)

    kernel = make_netclassif_kernel(F, E, Wp, l1, l5)

    # Advisory cost estimate for XLA's scheduler (true layer dims, not padded).
    layer_dims = [(F - 1, 32), (32, 32), (32, 28), (28, E),
                  (E + 1, 128), (128, 128), (128, 50), (50, 1)]
    flops_per_row = 2 * sum(fi * fo for fi, fo in layer_dims)
    param_bytes = (phi_w.size * 4 + phi_b.size * 4
                   + psi_w.size * 2 + psi_b.size * 4)
    cost = pl.CostEstimate(
        flops=int(N * flops_per_row),
        transcendentals=int(N),                  # one sigmoid (exp) per row
        bytes_accessed=int(N * 4 * (F + E + 2) + param_bytes),
    )

    out = pl.pallas_call(
        kernel,
        out_shape=jax.ShapeDtypeStruct((N, E + 2), f32),
        grid=grid,
        in_specs=[
            pl.BlockSpec((tm, F), lambda i: (i, 0)),          # fused x|t input
            pl.BlockSpec(phi_w.shape, lambda i: (0, 0)),      # VMEM-resident
            pl.BlockSpec(phi_b.shape, lambda i: (0, 0)),
            pl.BlockSpec(psi_w.shape, lambda i: (0, 0)),
            pl.BlockSpec(psi_b.shape, lambda i: (0, 0)),
        ],
        out_specs=pl.BlockSpec((tm, E + 2), lambda i: (i, 0)),  # fused output
        compiler_params=pltpu.CompilerParams(
            dimension_semantics=("parallel",),     # v7x: shard batch over 2 TCs
            vmem_limit_bytes=32 * 1024 * 1024,     # raise v5e's 16 MiB default
        ),
        cost_estimate=cost,
    )(inp, phi_w, phi_b, psi_w, psi_b)

    phi_t = out[:, :E + 1]
    sigma = out[:, E + 1:]
    return phi_t, sigma


def netclassif_reference(inp, params_flat, encoded_features):
    """Pure-JAX f32 reference mirroring the PyTorch forward, for validation."""
    (w1, b1, w2, b2, w3, b3, w4, b4,
     w5, b5, w6, b6, w7, b7, w8, b8) = params_flat
    x, t = inp[:, :-1], inp[:, -1:]
    h = _leaky_relu(x @ w1 + b1)
    h = jnp.maximum(h @ w2 + b2, 0.0)
    h = _leaky_relu(h @ w3 + b3)
    phi = h @ w4 + b4
    phi_t = jnp.concatenate([phi, t], axis=1)
    g = _leaky_relu(phi_t @ w5 + b5)
    g = _leaky_relu(g @ w6 + b6)
    g = jnp.maximum(g @ w7 + b7, 0.0)
    sigma = jax.nn.sigmoid(g @ w8 + b8)
    return phi_t, sigma


if __name__ == "__main__":
    in_features = 9        # -> x has 8 covariate columns, 1 treatment column
    encoded_features = 8
    batch = 16

    key = jax.random.PRNGKey(0)
    k_data, k_t, k_param = jax.random.split(key, 3)

    x = jax.random.normal(k_data, (batch, in_features - 1), jnp.float32)
    t = (jax.random.uniform(k_t, (batch, 1)) > 0.5).astype(jnp.float32)
    inp = jnp.concatenate([x, t], axis=1)          # (N, in_features)

    params = init_params(k_param, in_features, encoded_features)

    phi_t, sigma = netclassif_forward(inp, params, encoded_features)
    jax.block_until_ready((phi_t, sigma))

    phi_t_ref, sigma_ref = netclassif_reference(inp, params, encoded_features)
    assert phi_t.shape == (batch, encoded_features + 1)
    assert sigma.shape == (batch, 1)
    # Treatment column is passed through exactly.
    assert jnp.array_equal(phi_t[:, -1:], t)
    # phi stack is f32 in-kernel; psi uses bf16 MXU inputs with f32 accumulation.
    assert jnp.allclose(phi_t, phi_t_ref, atol=5e-2, rtol=5e-2)
    assert jnp.allclose(sigma, sigma_ref, atol=5e-2, rtol=5e-2)

    print("KERNEL_OK")
</pallas_src>

<mosaic_0001>
module attributes {stable_mosaic.version = 11 : i64} {
  func.func @kernel(%arg0: i32, %arg1: memref<8x9xf32, #tpu.memory_space<vmem>>, %arg2: memref<104x32xf32, #tpu.memory_space<vmem>>, %arg3: memref<32x32xf32, #tpu.memory_space<vmem>>, %arg4: memref<400x128xbf16, #tpu.memory_space<vmem>>, %arg5: memref<32x128xf32, #tpu.memory_space<vmem>>, %arg6: memref<8x10xf32, #tpu.memory_space<vmem>>) attributes {dimension_semantics = [#tpu.dimension_semantics<parallel>], iteration_bounds = array<i64: 2>, scalar_prefetch = 0 : i64, scratch_operands = 0 : i64, tpu.core_type = #tpu.core_type<tc>, window_params = [{transform_indices = @transform_0, window_bounds = array<i64: 8, 9>}, {pipeline_mode = #tpu.pipeline_mode<synchronous>, transform_indices = @transform_1, window_bounds = array<i64: 104, 32>}, {pipeline_mode = #tpu.pipeline_mode<synchronous>, transform_indices = @transform_2, window_bounds = array<i64: 32, 32>}, {pipeline_mode = #tpu.pipeline_mode<synchronous>, transform_indices = @transform_3, window_bounds = array<i64: 400, 128>}, {pipeline_mode = #tpu.pipeline_mode<synchronous>, transform_indices = @transform_4, window_bounds = array<i64: 32, 128>}, {transform_indices = @transform_5, window_bounds = array<i64: 8, 10>}]} {
    %c0 = arith.constant 0 : index
    %c0_0 = arith.constant 0 : index
    %0 = vector.load %arg1[%c0, %c0_0] : memref<8x9xf32, #tpu.memory_space<vmem>>, vector<8x8xf32>
    %c0_1 = arith.constant 0 : index
    %c8 = arith.constant 8 : index
    %1 = vector.load %arg1[%c0_1, %c8] : memref<8x9xf32, #tpu.memory_space<vmem>>, vector<8x1xf32>
    %c0_2 = arith.constant 0 : index
    %c0_3 = arith.constant 0 : index
    %2 = vector.load %arg2[%c0_2, %c0_3] : memref<104x32xf32, #tpu.memory_space<vmem>>, vector<8x32xf32>
    %cst = arith.constant dense<0.000000e+00> : vector<8x32xf32>
    %3 = tpu.matmul %0, %2, %cst {dimension_numbers = #tpu.dot_dimension_numbers<[1], [0], [0], [1], [0, 0, 1, 1], [], []>} : vector<8x8xf32>, vector<8x32xf32>, vector<8x32xf32> -> vector<8x32xf32>
    %c0_4 = arith.constant 0 : index
    %c0_5 = arith.constant 0 : index
    %4 = vector.load %arg3[%c0_4, %c0_5] : memref<32x32xf32, #tpu.memory_space<vmem>>, vector<1x32xf32>
    %5 = vector.broadcast %4 : vector<1x32xf32> to vector<8x32xf32>
    %6 = arith.addf %3, %5 : vector<8x32xf32>
    %cst_6 = arith.constant 0.000000e+00 : f32
    %7 = vector.broadcast %cst_6 : f32 to vector<8x32xf32>
    %8 = arith.cmpf oge, %6, %7 : vector<8x32xf32>
    %cst_7 = arith.constant 0.00999999977 : f32
    %9 = vector.broadcast %cst_7 : f32 to vector<8x32xf32>
    %10 = arith.mulf %9, %6 : vector<8x32xf32>
    %11 = arith.select %8, %6, %10 : vector<8x32xi1>, vector<8x32xf32>
    %c8_8 = arith.constant 8 : index
    %c0_9 = arith.constant 0 : index
    %12 = vector.load %arg2[%c8_8, %c0_9] : memref<104x32xf32, #tpu.memory_space<vmem>>, vector<32x32xf32>
    %cst_10 = arith.constant dense<0.000000e+00> : vector<8x32xf32>
    %13 = tpu.matmul %11, %12, %cst_10 {dimension_numbers = #tpu.dot_dimension_numbers<[1], [0], [0], [1], [0, 0, 1, 1], [], []>} : vector<8x32xf32>, vector<32x32xf32>, vector<8x32xf32> -> vector<8x32xf32>
    %c8_11 = arith.constant 8 : index
    %c0_12 = arith.constant 0 : index
    %14 = vector.load %arg3[%c8_11, %c0_12] : memref<32x32xf32, #tpu.memory_space<vmem>>, vector<1x32xf32>
    %15 = vector.broadcast %14 : vector<1x32xf32> to vector<8x32xf32>
    %16 = arith.addf %13, %15 : vector<8x32xf32>
    %cst_13 = arith.constant 0.000000e+00 : f32
    %17 = vector.broadcast %cst_13 : f32 to vector<8x32xf32>
    %18 = arith.maximumf %16, %17 : vector<8x32xf32>
    %c40 = arith.constant 40 : index
    %c0_14 = arith.constant 0 : index
    %19 = vector.load %arg2[%c40, %c0_14] : memref<104x32xf32, #tpu.memory_space<vmem>>, vector<32x32xf32>
    %cst_15 = arith.constant dense<0.000000e+00> : vector<8x32xf32>
    %20 = tpu.matmul %18, %19, %cst_15 {dimension_numbers = #tpu.dot_dimension_numbers<[1], [0], [0], [1], [0, 0, 1, 1], [], []>} : vector<8x32xf32>, vector<32x32xf32>, vector<8x32xf32> -> vector<8x32xf32>
    %c16 = arith.constant 16 : index
    %c0_16 = arith.constant 0 : index
    %21 = vector.load %arg3[%c16, %c0_16] : memref<32x32xf32, #tpu.memory_space<vmem>>, vector<1x32xf32>
    %22 = vector.broadcast %21 : vector<1x32xf32> to vector<8x32xf32>
    %23 = arith.addf %20, %22 : vector<8x32xf32>
    %cst_17 = arith.constant 0.000000e+00 : f32
    %24 = vector.broadcast %cst_17 : f32 to vector<8x32xf32>
    %25 = arith.cmpf oge, %23, %24 : vector<8x32xf32>
    %cst_18 = arith.constant 0.00999999977 : f32
    %26 = vector.broadcast %cst_18 : f32 to vector<8x32xf32>
    %27 = arith.mulf %26, %23 : vector<8x32xf32>
    %28 = arith.select %25, %23, %27 : vector<8x32xi1>, vector<8x32xf32>
    %c72 = arith.constant 72 : index
    %c0_19 = arith.constant 0 : index
    %29 = vector.load %arg2[%c72, %c0_19] : memref<104x32xf32, #tpu.memory_space<vmem>>, vector<32x32xf32>
    %cst_20 = arith.constant dense<0.000000e+00> : vector<8x32xf32>
    %30 = tpu.matmul %28, %29, %cst_20 {dimension_numbers = #tpu.dot_dimension_numbers<[1], [0], [0], [1], [0, 0, 1, 1], [], []>} : vector<8x32xf32>, vector<32x32xf32>, vector<8x32xf32> -> vector<8x32xf32>
    %c24 = arith.constant 24 : index
    %c0_21 = arith.constant 0 : index
    %31 = vector.load %arg3[%c24, %c0_21] : memref<32x32xf32, #tpu.memory_space<vmem>>, vector<1x32xf32>
    %32 = vector.broadcast %31 : vector<1x32xf32> to vector<8x32xf32>
    %33 = arith.addf %30, %32 : vector<8x32xf32>
    %34 = vector.extract_strided_slice %33 {offsets = [0, 0], sizes = [8, 8], strides = [1, 1]} : vector<8x32xf32> to vector<8x8xf32>
    %35 = tpu.concatenate %34, %1 in 1 : vector<8x8xf32>, vector<8x1xf32> -> vector<8x9xf32>
    %cst_22 = arith.constant 0.000000e+00 : f32
    %36 = vector.broadcast %cst_22 : f32 to vector<8x7xf32>
    %37 = tpu.concatenate %35, %36 in 1 : vector<8x9xf32>, vector<8x7xf32> -> vector<8x16xf32>
    %38 = arith.truncf %37 : vector<8x16xf32> to vector<8x16xbf16>
    %c0_23 = arith.constant 0 : index
    %c0_24 = arith.constant 0 : index
    %39 = vector.load %arg4[%c0_23, %c0_24] : memref<400x128xbf16, #tpu.memory_space<vmem>>, vector<16x128xbf16>
    %cst_25 = arith.constant dense<0.000000e+00> : vector<8x128xf32>
    %40 = tpu.matmul %38, %39, %cst_25 {dimension_numbers = #tpu.dot_dimension_numbers<[1], [0], [0], [1], [0, 0, 1, 1], [], []>} : vector<8x16xbf16>, vector<16x128xbf16>, vector<8x128xf32> -> vector<8x128xf32>
    %c0_26 = arith.constant 0 : index
    %c0_27 = arith.constant 0 : index
    %41 = vector.load %arg5[%c0_26, %c0_27] : memref<32x128xf32, #tpu.memory_space<vmem>>, vector<1x128xf32>
    %42 = vector.broadcast %41 : vector<1x128xf32> to vector<8x128xf32>
    %43 = arith.addf %40, %42 : vector<8x128xf32>
    %cst_28 = arith.constant 0.000000e+00 : f32
    %44 = vector.broadcast %cst_28 : f32 to vector<8x128xf32>
    %45 = arith.cmpf oge, %43, %44 : vector<8x128xf32>
    %cst_29 = arith.constant 0.00999999977 : f32
    %46 = vector.broadcast %cst_29 : f32 to vector<8x128xf32>
    %47 = arith.mulf %46, %43 : vector<8x128xf32>
    %48 = arith.select %45, %43, %47 : vector<8x128xi1>, vector<8x128xf32>
    %49 = arith.truncf %48 : vector<8x128xf32> to vector<8x128xbf16>
    %c16_30 = arith.constant 16 : index
    %c0_31 = arith.constant 0 : index
    %50 = vector.load %arg4[%c16_30, %c0_31] : memref<400x128xbf16, #tpu.memory_space<vmem>>, vector<128x128xbf16>
    %cst_32 = arith.constant dense<0.000000e+00> : vector<8x128xf32>
    %51 = tpu.matmul %49, %50, %cst_32 {dimension_numbers = #tpu.dot_dimension_numbers<[1], [0], [0], [1], [0, 0, 1, 1], [], []>} : vector<8x128xbf16>, vector<128x128xbf16>, vector<8x128xf32> -> vector<8x128xf32>
    %c8_33 = arith.constant 8 : index
    %c0_34 = arith.constant 0 : index
    %52 = vector.load %arg5[%c8_33, %c0_34] : memref<32x128xf32, #tpu.memory_space<vmem>>, vector<1x128xf32>
    %53 = vector.broadcast %52 : vector<1x128xf32> to vector<8x128xf32>
    %54 = arith.addf %51, %53 : vector<8x128xf32>
    %cst_35 = arith.constant 0.000000e+00 : f32
    %55 = vector.broadcast %cst_35 : f32 to vector<8x128xf32>
    %56 = arith.cmpf oge, %54, %55 : vector<8x128xf32>
    %cst_36 = arith.constant 0.00999999977 : f32
    %57 = vector.broadcast %cst_36 : f32 to vector<8x128xf32>
    %58 = arith.mulf %57, %54 : vector<8x128xf32>
    %59 = arith.select %56, %54, %58 : vector<8x128xi1>, vector<8x128xf32>
    %60 = arith.truncf %59 : vector<8x128xf32> to vector<8x128xbf16>
    %c144 = arith.constant 144 : index
    %c0_37 = arith.constant 0 : index
    %61 = vector.load %arg4[%c144, %c0_37] : memref<400x128xbf16, #tpu.memory_space<vmem>>, vector<128x128xbf16>
    %cst_38 = arith.constant dense<0.000000e+00> : vector<8x128xf32>
    %62 = tpu.matmul %60, %61, %cst_38 {dimension_numbers = #tpu.dot_dimension_numbers<[1], [0], [0], [1], [0, 0, 1, 1], [], []>} : vector<8x128xbf16>, vector<128x128xbf16>, vector<8x128xf32> -> vector<8x128xf32>
    %c16_39 = arith.constant 16 : index
    %c0_40 = arith.constant 0 : index
    %63 = vector.load %arg5[%c16_39, %c0_40] : memref<32x128xf32, #tpu.memory_space<vmem>>, vector<1x128xf32>
    %64 = vector.broadcast %63 : vector<1x128xf32> to vector<8x128xf32>
    %65 = arith.addf %62, %64 : vector<8x128xf32>
    %cst_41 = arith.constant 0.000000e+00 : f32
    %66 = vector.broadcast %cst_41 : f32 to vector<8x128xf32>
    %67 = arith.maximumf %65, %66 : vector<8x128xf32>
    %68 = arith.truncf %67 : vector<8x128xf32> to vector<8x128xbf16>
    %c272 = arith.constant 272 : index
    %c0_42 = arith.constant 0 : index
    %69 = vector.load %arg4[%c272, %c0_42] : memref<400x128xbf16, #tpu.memory_space<vmem>>, vector<128x128xbf16>
    %cst_43 = arith.constant dense<0.000000e+00> : vector<8x128xf32>
    %70 = tpu.matmul %68, %69, %cst_43 {dimension_numbers = #tpu.dot_dimension_numbers<[1], [0], [0], [1], [0, 0, 1, 1], [], []>} : vector<8x128xbf16>, vector<128x128xbf16>, vector<8x128xf32> -> vector<8x128xf32>
    %c24_44 = arith.constant 24 : index
    %c0_45 = arith.constant 0 : index
    %71 = vector.load %arg5[%c24_44, %c0_45] : memref<32x128xf32, #tpu.memory_space<vmem>>, vector<1x128xf32>
    %72 = vector.broadcast %71 : vector<1x128xf32> to vector<8x128xf32>
    %73 = arith.addf %70, %72 : vector<8x128xf32>
    %74 = vector.extract_strided_slice %73 {offsets = [0, 0], sizes = [8, 1], strides = [1, 1]} : vector<8x128xf32> to vector<8x1xf32>
    %75 = arith.negf %74 : vector<8x1xf32>
    %76 = math.exp %75 : vector<8x1xf32>
    %cst_46 = arith.constant 1.000000e+00 : f32
    %77 = vector.broadcast %cst_46 : f32 to vector<8x1xf32>
    %78 = arith.addf %77, %76 : vector<8x1xf32>
    %79 = arith.divf %77, %78 : vector<8x1xf32>
    %80 = tpu.concatenate %35, %79 in 1 : vector<8x9xf32>, vector<8x1xf32> -> vector<8x10xf32>
    %c0_47 = arith.constant 0 : index
    %c0_48 = arith.constant 0 : index
    %81 = vector.load %arg6[%c0_47, %c0_48] : memref<8x10xf32, #tpu.memory_space<vmem>>, vector<8x10xf32>
    tpu.vector_store %arg6[%c0_47, %c0_48], %80 {strides = array<i32>} : memref<8x10xf32, #tpu.memory_space<vmem>>, vector<8x10xf32>,
    return
  }
  func.func @transform_0(%arg0: i32) -> (i32, i32) {
    %c0_i32 = arith.constant 0 : i32
    %c0_i32_0 = arith.constant 0 : i32
    return %arg0, %c0_i32 : i32, i32
  }
  func.func @transform_1(%arg0: i32) -> (i32, i32) {
    %c0_i32 = arith.constant 0 : i32
    %c0_i32_0 = arith.constant 0 : i32
    %c0_i32_1 = arith.constant 0 : i32
    return %c0_i32, %c0_i32_0 : i32, i32
  }
  func.func @transform_2(%arg0: i32) -> (i32, i32) {
    %c0_i32 = arith.constant 0 : i32
    %c0_i32_0 = arith.constant 0 : i32
    %c0_i32_1 = arith.constant 0 : i32
    return %c0_i32, %c0_i32_0 : i32, i32
  }
  func.func @transform_3(%arg0: i32) -> (i32, i32) {
    %c0_i32 = arith.constant 0 : i32
    %c0_i32_0 = arith.constant 0 : i32
    %c0_i32_1 = arith.constant 0 : i32
    return %c0_i32, %c0_i32_0 : i32, i32
  }
  func.func @transform_4(%arg0: i32) -> (i32, i32) {
    %c0_i32 = arith.constant 0 : i32
    %c0_i32_0 = arith.constant 0 : i32
    %c0_i32_1 = arith.constant 0 : i32
    return %c0_i32, %c0_i32_0 : i32, i32
  }
  func.func @transform_5(%arg0: i32) -> (i32, i32) {
    %c0_i32 = arith.constant 0 : i32
    %c0_i32_0 = arith.constant 0 : i32
    return %arg0, %c0_i32 : i32, i32
  }
}

</mosaic_0001>

<llo_original>
// kernel: netclassif_forward.1
$region0: #{netclassif_forward.1}
  #allocation0 [shape = 'u32[]', space=smem, size = 0x4, offset = 0x4, fixed_abs, tag = 'smem constant byte address 0x4 - core index']
  #allocation1 [shape = 'u32[144,128]{1,0:T(1,128)}', space=vmem, size = 0x12000, scoped, tag = 'internal scratch']
  %s0 = inlined_call_operand.vmem [shape: f32[16,9], index: 0, kind: input, shape index: {}]
  %s1 = inlined_call_operand.vmem [shape: f32[104,32], index: 1, kind: input, shape index: {}]
  %s2 = inlined_call_operand.vmem [shape: f32[32,32], index: 2, kind: input, shape index: {}]
  %s3 = inlined_call_operand.vmem [shape: bf16[400,128], index: 3, kind: input, shape index: {}]
  %s4 = inlined_call_operand.vmem [shape: f32[32,128], index: 4, kind: input, shape index: {}]
  %s5 = inlined_call_operand.vmem [shape: f32[16,10], index: 5, kind: output, shape index: {}]
  %s6 = sld [smem:[#allocation0]]
  $region53: #{netclassif_forward.1} parent=0
    _
  %s8 = ssub.s32 1, %s6
  %s9 = scalar_select 0, %s8, %s6
  loop: start=0, step=1, limit=4
  $region2: #{netclassif_forward.1} parent=0 // loop_pre_header
    _
  $region3: #{netclassif_forward.1} parent=0 // loop_header
    %s11 = sphi 0, %s15
    %p12 = scmp.ge.s32.totalorder %s11, 4
    %s21 = sphi 0, %s23
    %s24 = sphi 0, %s21
    %s25 = sphi 0, %s24
    %s41 = sphi 0, %s25
    %s45 = sphi 0, %s45
    %s47 = sphi 0, %s45
    %s48 = sphi 0, %s47
    %s62 = sphi 0, %s48
    %s66 = sphi 0, %s66
    %s68 = sphi 0, %s66
    %s69 = sphi 0, %s68
    %s83 = sphi 0, %s69
    %s87 = sphi 0, %s87
    %s89 = sphi 0, %s87
    %s90 = sphi 0, %s89
    %s104 = sphi 0, %s90
    %s108 = sphi 0, %s108
    %s110 = sphi 0, %s108
    %s111 = sphi 0, %s110
    %s125 = sphi 0, %s111
    %s131 = sphi 0, %s133
    %s134 = sphi 0, %s131
    %s135 = sphi 0, %s134
    %s151 = sphi 0, %s135
  $region4: #{netclassif_forward.1} parent=0 // loop_header_branch
    %14 = sbr.rel (%p12) target = $region8
  $region5: #{netclassif_forward.1} parent=0 // loop_body
    %s16 = ssub.s32 %s11, 1
    %s17 = ssub.s32 %s11, 2
    %s18 = sadd.s32 %s11, 1
    %s19 = ssub.s32 %s11, %s18
    %p20 = scmp.eq.s32.totalorder %s19, 0
    %s22 = sadd.s32 %s21, 1
    %s23 = scalar_select %p20, %s21, %s22
    %p26 = pneg %p20
    %p27 = scmp.eq.s32.totalorder %s11, 1
    %p28 = por %p26, %p27
    %p29 = scmp.ne.s32.totalorder %s21, %s24
    %p30 = scmp.eq.s32.totalorder %s11, 0
    %p31 = por %p29, %p30
    %p32 = scmp.ne.s32.totalorder %s21, %s24
    %p33 = scmp.eq.s32.totalorder %s16, 1
    %p34 = por %p32, %p33
    %p35 = scmp.ne.s32.totalorder %s24, %s25
    %p36 = scmp.eq.s32.totalorder %s16, 0
    %p37 = por %p35, %p36
    %p38 = scmp.ne.s32.totalorder %s24, %s25
    %p39 = scmp.eq.s32.totalorder %s17, 1
    %p40 = por %p38, %p39
    %p42 = scmp.ne.s32.totalorder %s25, %s41
    %p43 = scmp.eq.s32.totalorder %s17, 0
    %p44 = por %p42, %p43
    %s46 = sadd.s32 %s45, 1
    %p49 = scmp.eq.s32.totalorder %s11, 1
    %p50 = scmp.ne.s32.totalorder %s45, %s47
    %p51 = scmp.eq.s32.totalorder %s11, 0
    %p52 = por %p50, %p51
    %p53 = scmp.ne.s32.totalorder %s45, %s47
    %p54 = scmp.eq.s32.totalorder %s16, 1
    %p55 = por %p53, %p54
    %p56 = scmp.ne.s32.totalorder %s47, %s48
    %p57 = scmp.eq.s32.totalorder %s16, 0
    %p58 = por %p56, %p57
    %p59 = scmp.ne.s32.totalorder %s47, %s48
    %p60 = scmp.eq.s32.totalorder %s17, 1
    %p61 = por %p59, %p60
    %p63 = scmp.ne.s32.totalorder %s48, %s62
    %p64 = scmp.eq.s32.totalorder %s17, 0
    %p65 = por %p63, %p64
    %s67 = sadd.s32 %s66, 1
    %p70 = scmp.eq.s32.totalorder %s11, 1
    %p71 = scmp.ne.s32.totalorder %s66, %s68
    %p72 = scmp.eq.s32.totalorder %s11, 0
    %p73 = por %p71, %p72
    %p74 = scmp.ne.s32.totalorder %s66, %s68
    %p75 = scmp.eq.s32.totalorder %s16, 1
    %p76 = por %p74, %p75
    %p77 = scmp.ne.s32.totalorder %s68, %s69
    %p78 = scmp.eq.s32.totalorder %s16, 0
    %p79 = por %p77, %p78
    %p80 = scmp.ne.s32.totalorder %s68, %s69
    %p81 = scmp.eq.s32.totalorder %s17, 1
    %p82 = por %p80, %p81
    %p84 = scmp.ne.s32.totalorder %s69, %s83
    %p85 = scmp.eq.s32.totalorder %s17, 0
    %p86 = por %p84, %p85
    %s88 = sadd.s32 %s87, 1
    %p91 = scmp.eq.s32.totalorder %s11, 1
    %p92 = scmp.ne.s32.totalorder %s87, %s89
    %p93 = scmp.eq.s32.totalorder %s11, 0
    %p94 = por %p92, %p93
    %p95 = scmp.ne.s32.totalorder %s87, %s89
    %p96 = scmp.eq.s32.totalorder %s16, 1
    %p97 = por %p95, %p96
    %p98 = scmp.ne.s32.totalorder %s89, %s90
    %p99 = scmp.eq.s32.totalorder %s16, 0
    %p100 = por %p98, %p99
    %p101 = scmp.ne.s32.totalorder %s89, %s90
    %p102 = scmp.eq.s32.totalorder %s17, 1
    %p103 = por %p101, %p102
    %p105 = scmp.ne.s32.totalorder %s90, %s104
    %p106 = scmp.eq.s32.totalorder %s17, 0
    %p107 = por %p105, %p106
    %s109 = sadd.s32 %s108, 1
    %p112 = scmp.eq.s32.totalorder %s11, 1
    %p113 = scmp.ne.s32.totalorder %s108, %s110
    %p114 = scmp.eq.s32.totalorder %s11, 0
    %p115 = por %p113, %p114
    %p116 = scmp.ne.s32.totalorder %s108, %s110
    %p117 = scmp.eq.s32.totalorder %s16, 1
    %p118 = por %p116, %p117
    %p119 = scmp.ne.s32.totalorder %s110, %s111
    %p120 = scmp.eq.s32.totalorder %s16, 0
    %p121 = por %p119, %p120
    %p122 = scmp.ne.s32.totalorder %s110, %s111
    %p123 = scmp.eq.s32.totalorder %s17, 1
    %p124 = por %p122, %p123
    %p126 = scmp.ne.s32.totalorder %s111, %s125
    %p127 = scmp.eq.s32.totalorder %s17, 0
    %p128 = por %p126, %p127
    %s129 = ssub.s32 %s11, %s18
    %p130 = scmp.eq.s32.totalorder %s129, 0
    %s132 = sadd.s32 %s131, 1
    %s133 = scalar_select %p130, %s131, %s132
    %p136 = pneg %p130
    %p137 = scmp.eq.s32.totalorder %s11, 1
    %p138 = por %p136, %p137
    %p139 = scmp.ne.s32.totalorder %s131, %s134
    %p140 = scmp.eq.s32.totalorder %s11, 0
    %p141 = por %p139, %p140
    %p142 = scmp.ne.s32.totalorder %s131, %s134
    %p143 = scmp.eq.s32.totalorder %s16, 1
    %p144 = por %p142, %p143
    %p145 = scmp.ne.s32.totalorder %s134, %s135
    %p146 = scmp.eq.s32.totalorder %s16, 0
    %p147 = por %p145, %p146
    %p148 = scmp.ne.s32.totalorder %s134, %s135
    %p149 = scmp.eq.s32.totalorder %s17, 1
    %p150 = por %p148, %p149
    %p152 = scmp.ne.s32.totalorder %s135, %s151
    %p153 = scmp.eq.s32.totalorder %s17, 0
    %p154 = por %p152, %p153
    %p155 = scmp.le.s32.totalorder 1, %s11
    %p156 = scmp.lt.s32.totalorder %s11, 3
    %p157 = pnand %p155, %p156
    %p158 = pneg %p157
    // Predicated region
    $region9: #{netclassif_forward.1} parent=5 // pred_check
      _
    $region10: #{netclassif_forward.1} parent=5 // pred_check_branch
      %160 = sbr.rel (%p157) target = $region12
    $region11: #{netclassif_forward.1} parent=5 // pred_region
      %s161 = ssub.s32 %s11, 1
      // Predicated region
      $region13: #{netclassif_forward.1} parent=11 // pred_check
        %p162 = pneg %p58
      $region14: #{netclassif_forward.1} parent=11 // pred_check_branch
        %164 = sbr.rel (%p162) target = $region16
      $region15: #{netclassif_forward.1} parent=11 // pred_region
        _
      $region16: #{netclassif_forward.1} parent=11 // pred_fallthru
        _
      // Predicated region
      $region17: #{netclassif_forward.1} parent=11 // pred_check
        %p165 = pneg %p79
      $region18: #{netclassif_forward.1} parent=11 // pred_check_branch
        %167 = sbr.rel (%p165) target = $region20
      $region19: #{netclassif_forward.1} parent=11 // pred_region
        _
      $region20: #{netclassif_forward.1} parent=11 // pred_fallthru
        _
      // Predicated region
      $region21: #{netclassif_forward.1} parent=11 // pred_check
        %p168 = pneg %p100
      $region22: #{netclassif_forward.1} parent=11 // pred_check_branch
        %170 = sbr.rel (%p168) target = $region24
      $region23: #{netclassif_forward.1} parent=11 // pred_region
        _
      $region24: #{netclassif_forward.1} parent=11 // pred_fallthru
        _
      // Predicated region
      $region25: #{netclassif_forward.1} parent=11 // pred_check
        %p171 = pneg %p121
      $region26: #{netclassif_forward.1} parent=11 // pred_check_branch
        %173 = sbr.rel (%p171) target = $region28
      $region27: #{netclassif_forward.1} parent=11 // pred_region
        _
      $region28: #{netclassif_forward.1} parent=11 // pred_fallthru
        _
    $region12: #{netclassif_forward.1} parent=5 // pred_fallthru
      _
    %p174 = scmp.lt.s32.totalorder %s11, 2
    // Predicated region
    $region29: #{netclassif_forward.1} parent=5 // pred_check
      %p175 = pneg %p174
    $region30: #{netclassif_forward.1} parent=5 // pred_check_branch
      %177 = sbr.rel (%p175) target = $region32
    $region31: #{netclassif_forward.1} parent=5 // pred_region
      // Predicated region
      $region33: #{netclassif_forward.1} parent=31 // pred_check
        %p178 = pneg %p31
      $region34: #{netclassif_forward.1} parent=31 // pred_check_branch
        %180 = sbr.rel (%p178) target = $region36
      $region35: #{netclassif_forward.1} parent=31 // pred_region
        %p181 = scmp.lt.s32.totalorder %s11, 1
        %s182 = scalar_select %p181, %s11, 1
        %s183 = smul.addr %s182, 8
        %s184 = scalar_lea.vmem %s0, %s183
      $region36: #{netclassif_forward.1} parent=31 // pred_fallthru
        _
    $region32: #{netclassif_forward.1} parent=5 // pred_fallthru
      _
    %p185 = scmp.le.s32.totalorder 1, %s11
    %p186 = scmp.lt.s32.totalorder %s11, 3
    %p187 = pnand %p185, %p186
    %p188 = pneg %p187
    // Predicated region
    $region37: #{netclassif_forward.1} parent=5 // pred_check
      _
    $region38: #{netclassif_forward.1} parent=5 // pred_check_branch
      %190 = sbr.rel (%p187) target = $region40
    $region39: #{netclassif_forward.1} parent=5 // pred_region
      %s191 = ssub.s32 %s11, 1
      %p192 = scmp.lt.s32.totalorder %s16, 1
      %s193 = scalar_select %p192, %s16, 1
      %s194 = smul.addr %s193, 8
      %s195 = scalar_lea.vmem %s0, %s194
      %p196 = pneg %p37
      %p197 = pneg %p34
      %p198 = pneg %p58
      %p199 = pneg %p55
      %p200 = pneg %p79
      %p201 = pneg %p76
      %p202 = pneg %p100
      %p203 = pneg %p97
      %p204 = pneg %p121
      %p205 = pneg %p118
      %p206 = pneg %p147
      %p207 = pneg %p144
      %p208 = scmp.lt.s32.totalorder %s16, 1
      %s209 = scalar_select %p208, %s16, 1
      %s210 = smul.addr %s209, 8
      %s211 = scalar_lea.vmem %s5, %s210
      %p212 = scmp.lt.s32.totalorder %s16, 1
      %s213 = scalar_select %p212, %s16, 1
      %s214 = smul.addr %s213, 8
      %s215 = scalar_lea.vmem %s0, %s214
      %p216 = scmp.lt.s32.totalorder %s16, 1
      %s217 = scalar_select %p216, %s16, 1
      %s218 = smul.addr %s217, 8
      %s219 = scalar_lea.vmem %s5, %s218
      %v221 = vld [vmem:[%s215] sm:$0xff]
      %v222 = vld [vmem:[%s1] sm:$0xff]
      %v223 = vld [vmem:[%s2] sm:$0x1]
      %v224 = vlaneseq
      %v225 = vshrl.u32 %v224, 7
      %v226 = vsub.s32 0, %v225
      %v227 = vrot.slane %v223, %v226
      %vm228 = vcmask 64512
      %v230 = vsel %vm228, %v221, 0
      %232 = vmatprep.subr.mxu0 0.0
      %233 = vmatpush1.msra.mxu0 %v222
      %234 = vmatprep.subr.mxu0 0.0
      %235 = vmatpush1.msra.mxu0 0.0
      %236 = vmatprep.subr.mxu0 0.0
      %237 = vmatpush1.msra.mxu0 0.0
      %238 = vmatprep.subr.mxu0 0.0
      %239 = vmatpush1.msra.mxu0 0.0
      %240 = vmatprep.subr.mxu0 0.0
      %241 = vmatpush1.msra.mxu0 0.0
      %242 = vmatprep.subr.mxu0 0.0
      %243 = vmatpush1.msra.mxu0 0.0
      %244 = vmatprep.subr.mxu0 0.0
      %245 = vmatpush1.msra.mxu0 0.0
      %246 = vmatprep.subr.mxu0 0.0
      %247 = vmatpush1.msra.mxu0 0.0
      %248 = vmatprep.subr.mxu0 0.0
      %249 = vmatpush1.msra.mxu0 0.0
      %250 = vmatprep.subr.mxu0 0.0
      %251 = vmatpush1.msra.mxu0 0.0
      %252 = vmatprep.subr.mxu0 0.0
      %253 = vmatpush1.msra.mxu0 0.0
      %254 = vmatprep.subr.mxu0 0.0
      %255 = vmatpush1.msra.mxu0 0.0
      %256 = vmatprep.subr.mxu0 0.0
      %257 = vmatpush1.msra.mxu0 0.0
      %258 = vmatprep.subr.mxu0 0.0
      %259 = vmatpush1.msra.mxu0 0.0
      %260 = vmatprep.subr.mxu0 0.0
      %261 = vmatpush1.msra.mxu0 0.0
      %262 = vmatprep.subr.mxu0 0.0
      %263 = vmatpush1.msra.mxu0 0.0
      %264 = vmatprep.subr.mxu0 0.0
      %265 = vmatpush1.msra.mxu0 0.0
      %266 = vmatprep.subr.mxu0 0.0
      %267 = vmatpush1.msra.mxu0 0.0
      %268 = vmatprep.subr.mxu0 0.0
      %269 = vmatpush1.msra.mxu0 0.0
      %270 = vmatprep.subr.mxu0 0.0
      %271 = vmatpush1.msra.mxu0 0.0
      %272 = vmatprep.subr.mxu0 0.0
      %273 = vmatpush1.msra.mxu0 0.0
      %274 = vmatprep.subr.mxu0 0.0
      %275 = vmatpush1.msra.mxu0 0.0
      %276 = vmatprep.subr.mxu0 0.0
      %277 = vmatpush1.msra.mxu0 0.0
      %278 = vmatprep.subr.mxu0 0.0
      %279 = vmatpush1.msra.mxu0 0.0
      %280 = vmatprep.subr.mxu0 0.0
      %281 = vmatpush1.msra.mxu0 0.0
      %282 = vmatprep.subr.mxu0 0.0
      %283 = vmatpush1.msra.mxu0 0.0
      %284 = vmatprep.subr.mxu0 0.0
      %285 = vmatpush1.msra.mxu0 0.0
      %286 = vmatprep.subr.mxu0 0.0
      %287 = vmatpush1.msra.mxu0 0.0
      %288 = vmatprep.subr.mxu0 0.0
      %289 = vmatpush1.msra.mxu0 0.0
      %290 = vmatprep.subr.mxu0 0.0
      %291 = vmatpush1.msra.mxu0 0.0
      %292 = vmatprep.subr.mxu0 0.0
      %293 = vmatpush1.msra.mxu0 0.0
      %294 = vmatprep.subr.mxu0 0.0
      %295 = vmatpush1.msra.mxu0 0.0
      %296 = vmatprep.mubr.f32.mxu0 0.0
      %297 = vmatmul.mubr.f32.gmra.mrb[0].mxu0 %v230
      %v298 = vpop.f32.mrb[0].mxu0
      %v299 = vadd.f32 %v227, %v298
      %v300 = vpop.f32.mrb[0].mxu0
      %301 = vdwg.mxu0
      %vm302 = vcmp.ge.f32.partialorder %v299, 0.0
      %v303 = vmul.f32 %v299, 0.01
      %v304 = vsel %vm302, %v299, %v303
      %v305 = vld [vmem:[%s1 + $0x8] sm:$0xff]
      %v306 = vld [vmem:[%s1 + $0x10] sm:$0xff]
      %v307 = vld [vmem:[%s1 + $0x18] sm:$0xff]
      %v308 = vld [vmem:[%s1 + $0x20] sm:$0xff]
      %v309 = vld [vmem:[%s2 + $0x8] sm:$0x1]
      %v310 = vlaneseq
      %v311 = vshrl.u32 %v310, 7
      %v312 = vsub.s32 0, %v311
      %v313 = vrot.slane %v309, %v312
      %vm314 = vcmask 261120
      %v316 = vsel %vm314, %v304, 0
      %318 = vmatprep.subr.mxu0 0.0
      %319 = vmatpush1.msra.mxu0 %v305
      %320 = vmatprep.subr.mxu0 0.0
      %321 = vmatpush1.msra.mxu0 %v306
      %322 = vmatprep.subr.mxu0 0.0
      %323 = vmatpush1.msra.mxu0 %v307
      %324 = vmatprep.subr.mxu0 0.0
      %325 = vmatpush1.msra.mxu0 %v308
      %326 = vmatprep.subr.mxu0 0.0
      %327 = vmatpush1.msra.mxu0 0.0
      %328 = vmatprep.subr.mxu0 0.0
      %329 = vmatpush1.msra.mxu0 0.0
      %330 = vmatprep.subr.mxu0 0.0
      %331 = vmatpush1.msra.mxu0 0.0
      %332 = vmatprep.subr.mxu0 0.0
      %333 = vmatpush1.msra.mxu0 0.0
      %334 = vmatprep.subr.mxu0 0.0
      %335 = vmatpush1.msra.mxu0 0.0
      %336 = vmatprep.subr.mxu0 0.0
      %337 = vmatpush1.msra.mxu0 0.0
      %338 = vmatprep.subr.mxu0 0.0
      %339 = vmatpush1.msra.mxu0 0.0
      %340 = vmatprep.subr.mxu0 0.0
      %341 = vmatpush1.msra.mxu0 0.0
      %342 = vmatprep.subr.mxu0 0.0
      %343 = vmatpush1.msra.mxu0 0.0
      %344 = vmatprep.subr.mxu0 0.0
      %345 = vmatpush1.msra.mxu0 0.0
      %346 = vmatprep.subr.mxu0 0.0
      %347 = vmatpush1.msra.mxu0 0.0
      %348 = vmatprep.subr.mxu0 0.0
      %349 = vmatpush1.msra.mxu0 0.0
      %350 = vmatprep.subr.mxu0 0.0
      %351 = vmatpush1.msra.mxu0 0.0
      %352 = vmatprep.subr.mxu0 0.0
      %353 = vmatpush1.msra.mxu0 0.0
      %354 = vmatprep.subr.mxu0 0.0
      %355 = vmatpush1.msra.mxu0 0.0
      %356 = vmatprep.subr.mxu0 0.0
      %357 = vmatpush1.msra.mxu0 0.0
      %358 = vmatprep.subr.mxu0 0.0
      %359 = vmatpush1.msra.mxu0 0.0
      %360 = vmatprep.subr.mxu0 0.0
      %361 = vmatpush1.msra.mxu0 0.0
      %362 = vmatprep.subr.mxu0 0.0
      %363 = vmatpush1.msra.mxu0 0.0
      %364 = vmatprep.subr.mxu0 0.0
      %365 = vmatpush1.msra.mxu0 0.0
      %366 = vmatprep.subr.mxu0 0.0
      %367 = vmatpush1.msra.mxu0 0.0
      %368 = vmatprep.subr.mxu0 0.0
      %369 = vmatpush1.msra.mxu0 0.0
      %370 = vmatprep.subr.mxu0 0.0
      %371 = vmatpush1.msra.mxu0 0.0
      %372 = vmatprep.subr.mxu0 0.0
      %373 = vmatpush1.msra.mxu0 0.0
      %374 = vmatprep.subr.mxu0 0.0
      %375 = vmatpush1.msra.mxu0 0.0
      %376 = vmatprep.subr.mxu0 0.0
      %377 = vmatpush1.msra.mxu0 0.0
      %378 = vmatprep.subr.mxu0 0.0
      %379 = vmatpush1.msra.mxu0 0.0
      %380 = vmatprep.subr.mxu0 0.0
      %381 = vmatpush1.msra.mxu0 0.0
      %382 = vmatprep.mubr.f32.mxu0 0.0
      %383 = vmatmul.mubr.f32.gmra.mrb[0].mxu0 %v316
      %v384 = vpop.f32.mrb[0].mxu0
      %v385 = vadd.f32 %v313, %v384
      %v386 = vpop.f32.mrb[0].mxu0
      %387 = vdwg.mxu0
      %v388 = vmax.f32 %v385, 0.0
      %v389 = vld [vmem:[%s1 + $0x28] sm:$0xff]
      %v390 = vld [vmem:[%s1 + $0x30] sm:$0xff]
      %v391 = vld [vmem:[%s1 + $0x38] sm:$0xff]
      %v392 = vld [vmem:[%s1 + $0x40] sm:$0xff]
      %v393 = vld [vmem:[%s2 + $0x10] sm:$0x1]
      %v394 = vlaneseq
      %v395 = vshrl.u32 %v394, 7
      %v396 = vsub.s32 0, %v395
      %v397 = vrot.slane %v393, %v396
      %v399 = vsel %vm314, %v388, 0
      %401 = vmatprep.subr.mxu0 0.0
      %402 = vmatpush1.msra.mxu0 %v389
      %403 = vmatprep.subr.mxu0 0.0
      %404 = vmatpush1.msra.mxu0 %v390
      %405 = vmatprep.subr.mxu0 0.0
      %406 = vmatpush1.msra.mxu0 %v391
      %407 = vmatprep.subr.mxu0 0.0
      %408 = vmatpush1.msra.mxu0 %v392
      %409 = vmatprep.subr.mxu0 0.0
      %410 = vmatpush1.msra.mxu0 0.0
      %411 = vmatprep.subr.mxu0 0.0
      %412 = vmatpush1.msra.mxu0 0.0
      %413 = vmatprep.subr.mxu0 0.0
      %414 = vmatpush1.msra.mxu0 0.0
      %415 = vmatprep.subr.mxu0 0.0
      %416 = vmatpush1.msra.mxu0 0.0
      %417 = vmatprep.subr.mxu0 0.0
      %418 = vmatpush1.msra.mxu0 0.0
      %419 = vmatprep.subr.mxu0 0.0
      %420 = vmatpush1.msra.mxu0 0.0
      %421 = vmatprep.subr.mxu0 0.0
      %422 = vmatpush1.msra.mxu0 0.0
      %423 = vmatprep.subr.mxu0 0.0
      %424 = vmatpush1.msra.mxu0 0.0
      %425 = vmatprep.subr.mxu0 0.0
      %426 = vmatpush1.msra.mxu0 0.0
      %427 = vmatprep.subr.mxu0 0.0
      %428 = vmatpush1.msra.mxu0 0.0
      %429 = vmatprep.subr.mxu0 0.0
      %430 = vmatpush1.msra.mxu0 0.0
      %431 = vmatprep.subr.mxu0 0.0
      %432 = vmatpush1.msra.mxu0 0.0
      %433 = vmatprep.subr.mxu0 0.0
      %434 = vmatpush1.msra.mxu0 0.0
      %435 = vmatprep.subr.mxu0 0.0
      %436 = vmatpush1.msra.mxu0 0.0
      %437 = vmatprep.subr.mxu0 0.0
      %438 = vmatpush1.msra.mxu0 0.0
      %439 = vmatprep.subr.mxu0 0.0
      %440 = vmatpush1.msra.mxu0 0.0
      %441 = vmatprep.subr.mxu0 0.0
      %442 = vmatpush1.msra.mxu0 0.0
      %443 = vmatprep.subr.mxu0 0.0
      %444 = vmatpush1.msra.mxu0 0.0
      %445 = vmatprep.subr.mxu0 0.0
      %446 = vmatpush1.msra.mxu0 0.0
      %447 = vmatprep.subr.mxu0 0.0
      %448 = vmatpush1.msra.mxu0 0.0
      %449 = vmatprep.subr.mxu0 0.0
      %450 = vmatpush1.msra.mxu0 0.0
      %451 = vmatprep.subr.mxu0 0.0
      %452 = vmatpush1.msra.mxu0 0.0
      %453 = vmatprep.subr.mxu0 0.0
      %454 = vmatpush1.msra.mxu0 0.0
      %455 = vmatprep.subr.mxu0 0.0
      %456 = vmatpush1.msra.mxu0 0.0
      %457 = vmatprep.subr.mxu0 0.0
      %458 = vmatpush1.msra.mxu0 0.0
      %459 = vmatprep.subr.mxu0 0.0
      %460 = vmatpush1.msra.mxu0 0.0
      %461 = vmatprep.subr.mxu0 0.0
      %462 = vmatpush1.msra.mxu0 0.0
      %463 = vmatprep.subr.mxu0 0.0
      %464 = vmatpush1.msra.mxu0 0.0
      %465 = vmatprep.mubr.f32.mxu0 0.0
      %466 = vmatmul.mubr.f32.gmra.mrb[0].mxu0 %v399
      %v467 = vpop.f32.mrb[0].mxu0
      %v468 = vadd.f32 %v397, %v467
      %v469 = vpop.f32.mrb[0].mxu0
      %470 = vdwg.mxu0
      %vm471 = vcmp.ge.f32.partialorder %v468, 0.0
      %v472 = vmul.f32 %v468, 0.01
      %v473 = vsel %vm471, %v468, %v472
      %v474 = vld [vmem:[%s1 + $0x48] sm:$0xff]
      %v475 = vld [vmem:[%s1 + $0x50] sm:$0xff]
      %v476 = vld [vmem:[%s1 + $0x58] sm:$0xff]
      %v477 = vld [vmem:[%s1 + $0x60] sm:$0xff]
      %v478 = vld [vmem:[%s2 + $0x18] sm:$0x1]
      %v479 = vlaneseq
      %v480 = vshrl.u32 %v479, 7
      %v481 = vsub.s32 0, %v480
      %v482 = vrot.slane %v478, %v481
      %v484 = vsel %vm314, %v473, 0
      %486 = vmatprep.subr.mxu0 0.0
      %487 = vmatpush1.msra.mxu0 %v474
      %488 = vmatprep.subr.mxu0 0.0
      %489 = vmatpush1.msra.mxu0 %v475
      %490 = vmatprep.subr.mxu0 0.0
      %491 = vmatpush1.msra.mxu0 %v476
      %492 = vmatprep.subr.mxu0 0.0
      %493 = vmatpush1.msra.mxu0 %v477
      %494 = vmatprep.subr.mxu0 0.0
      %495 = vmatpush1.msra.mxu0 0.0
      %496 = vmatprep.subr.mxu0 0.0
      %497 = vmatpush1.msra.mxu0 0.0
      %498 = vmatprep.subr.mxu0 0.0
      %499 = vmatpush1.msra.mxu0 0.0
      %500 = vmatprep.subr.mxu0 0.0
      %501 = vmatpush1.msra.mxu0 0.0
      %502 = vmatprep.subr.mxu0 0.0
      %503 = vmatpush1.msra.mxu0 0.0
      %504 = vmatprep.subr.mxu0 0.0
      %505 = vmatpush1.msra.mxu0 0.0
      %506 = vmatprep.subr.mxu0 0.0
      %507 = vmatpush1.msra.mxu0 0.0
      %508 = vmatprep.subr.mxu0 0.0
      %509 = vmatpush1.msra.mxu0 0.0
      %510 = vmatprep.subr.mxu0 0.0
      %511 = vmatpush1.msra.mxu0 0.0
      %512 = vmatprep.subr.mxu0 0.0
      %513 = vmatpush1.msra.mxu0 0.0
      %514 = vmatprep.subr.mxu0 0.0
      %515 = vmatpush1.msra.mxu0 0.0
      %516 = vmatprep.subr.mxu0 0.0
      %517 = vmatpush1.msra.mxu0 0.0
      %518 = vmatprep.subr.mxu0 0.0
      %519 = vmatpush1.msra.mxu0 0.0
      %520 = vmatprep.subr.mxu0 0.0
      %521 = vmatpush1.msra.mxu0 0.0
      %522 = vmatprep.subr.mxu0 0.0
      %523 = vmatpush1.msra.mxu0 0.0
      %524 = vmatprep.subr.mxu0 0.0
      %525 = vmatpush1.msra.mxu0 0.0
      %526 = vmatprep.subr.mxu0 0.0
      %527 = vmatpush1.msra.mxu0 0.0
      %528 = vmatprep.subr.mxu0 0.0
      %529 = vmatpush1.msra.mxu0 0.0
      %530 = vmatprep.subr.mxu0 0.0
      %531 = vmatpush1.msra.mxu0 0.0
      %532 = vmatprep.subr.mxu0 0.0
      %533 = vmatpush1.msra.mxu0 0.0
      %534 = vmatprep.subr.mxu0 0.0
      %535 = vmatpush1.msra.mxu0 0.0
      %536 = vmatprep.subr.mxu0 0.0
      %537 = vmatpush1.msra.mxu0 0.0
      %538 = vmatprep.subr.mxu0 0.0
      %539 = vmatpush1.msra.mxu0 0.0
      %540 = vmatprep.subr.mxu0 0.0
      %541 = vmatpush1.msra.mxu0 0.0
      %542 = vmatprep.subr.mxu0 0.0
      %543 = vmatpush1.msra.mxu0 0.0
      %544 = vmatprep.subr.mxu0 0.0
      %545 = vmatpush1.msra.mxu0 0.0
      %546 = vmatprep.subr.mxu0 0.0
      %547 = vmatpush1.msra.mxu0 0.0
      %548 = vmatprep.subr.mxu0 0.0
      %549 = vmatpush1.msra.mxu0 0.0
      %550 = vmatprep.mubr.f32.mxu0 0.0
      %551 = vmatmul.mubr.f32.gmra.mrb[0].mxu0 %v484
      %v552 = vpop.f32.mrb[0].mxu0
      %v553 = vadd.f32 %v482, %v552
      %v554 = vpop.f32.mrb[0].mxu0
      %555 = vdwg.mxu0
      %v556 = vsel %vm228, %v553, %v221
      %vm557 = vcmask 72704
      %v558 = vsel %vm557, %v556, 0.0
      %v559 = vpack.c.bf16 %v558, %v558
      %v560 = vld [vmem:[%s3] sm:$0xf]
      %v561 = vld [vmem:[%s3 + $0x4] sm:$0xf]
      %v562 = vld [vmem:[%s4] sm:$0x1]
      %v563 = vlaneseq
      %v564 = vshrl.u32 %v563, 7
      %v565 = vsub.s32 0, %v564
      %v566 = vrot.slane %v562, %v565
      %v569 = vunpack.c.l.b16 %v560
      %v570 = vunpack.c.l.b16 %v561
      %v571 = vpack.c.b16 %v570, %v569
      %vm573 = vcmask 130048
      %v575 = vsel %vm573, %v559, 0
      %577 = vmatprep.subr.bf16.mxu0 0
      %578 = vmatpush1.bf16.msra.mxu0 %v571
      %579 = vmatprep.subr.bf16.mxu0 0
      %580 = vmatpush1.bf16.msra.mxu0 0
      %581 = vmatprep.subr.bf16.mxu0 0
      %582 = vmatpush1.bf16.msra.mxu0 0
      %583 = vmatprep.subr.bf16.mxu0 0
      %584 = vmatpush1.bf16.msra.mxu0 0
      %585 = vmatprep.subr.bf16.mxu0 0
      %586 = vmatpush1.bf16.msra.mxu0 0
      %587 = vmatprep.subr.bf16.mxu0 0
      %588 = vmatpush1.bf16.msra.mxu0 0
      %589 = vmatprep.subr.bf16.mxu0 0
      %590 = vmatpush1.bf16.msra.mxu0 0
      %591 = vmatprep.subr.bf16.mxu0 0
      %592 = vmatpush1.bf16.msra.mxu0 0
      %593 = vmatprep.subr.bf16.mxu0 0
      %594 = vmatpush1.bf16.msra.mxu0 0
      %595 = vmatprep.subr.bf16.mxu0 0
      %596 = vmatpush1.bf16.msra.mxu0 0
      %597 = vmatprep.subr.bf16.mxu0 0
      %598 = vmatpush1.bf16.msra.mxu0 0
      %599 = vmatprep.subr.bf16.mxu0 0
      %600 = vmatpush1.bf16.msra.mxu0 0
      %601 = vmatprep.subr.bf16.mxu0 0
      %602 = vmatpush1.bf16.msra.mxu0 0
      %603 = vmatprep.subr.bf16.mxu0 0
      %604 = vmatpush1.bf16.msra.mxu0 0
      %605 = vmatprep.subr.bf16.mxu0 0
      %606 = vmatpush1.bf16.msra.mxu0 0
      %607 = vmatprep.subr.bf16.mxu0 0
      %608 = vmatpush1.bf16.msra.mxu0 0
      %609 = vmatprep.mubr.bf16.mxu0 0
      %610 = vmatmul.mubr.bf16.gmra.mrb[0].mxu0 %v575
      %v611 = vpop.f32.mrb[0].mxu0
      %v612 = vadd.f32 %v566, %v611
      %v613 = vpop.f32.mrb[0].mxu0
      %v614 = vpop.f32.mrb[0].mxu0
      %v615 = vpop.f32.mrb[0].mxu0
      %616 = vdwg.mxu0
      %vm617 = vcmp.ge.f32.partialorder %v612, 0.0
      %v618 = vmul.f32 %v612, 0.01
      %v619 = vsel %vm617, %v612, %v618
      %v620 = vpack.c.bf16 %v619, %v619
      %v621 = vld [vmem:[%s3 + $0x8] sm:$0xf]
      %v622 = vld [vmem:[%s3 + $0xc] sm:$0xf]
      %v623 = vld [vmem:[%s3 + $0x10] sm:$0xf]
      %v624 = vld [vmem:[%s3 + $0x14] sm:$0xf]
      %v625 = vld [vmem:[%s3 + $0x18] sm:$0xf]
      %v626 = vld [vmem:[%s3 + $0x1c] sm:$0xf]
      %v627 = vld [vmem:[%s3 + $0x20] sm:$0xf]
      %v628 = vld [vmem:[%s3 + $0x24] sm:$0xf]
      %v629 = vld [vmem:[%s3 + $0x28] sm:$0xf]
      %v630 = vld [vmem:[%s3 + $0x2c] sm:$0xf]
      %v631 = vld [vmem:[%s3 + $0x30] sm:$0xf]
      %v632 = vld [vmem:[%s3 + $0x34] sm:$0xf]
      %v633 = vld [vmem:[%s3 + $0x38] sm:$0xf]
      %v634 = vld [vmem:[%s3 + $0x3c] sm:$0xf]
      %v635 = vld [vmem:[%s3 + $0x40] sm:$0xf]
      %v636 = vld [vmem:[%s3 + $0x44] sm:$0xf]
      %v637 = vld [vmem:[%s4 + $0x8] sm:$0x1]
      %v638 = vlaneseq
      %v639 = vshrl.u32 %v638, 7
      %v640 = vsub.s32 0, %v639
      %v641 = vrot.slane %v637, %v640
      %v658 = vunpack.c.l.b16 %v621
      %v659 = vunpack.c.l.b16 %v622
      %v660 = vunpack.c.l.b16 %v623
      %v661 = vunpack.c.l.b16 %v624
      %v662 = vunpack.c.l.b16 %v625
      %v663 = vunpack.c.l.b16 %v626
      %v664 = vunpack.c.l.b16 %v627
      %v665 = vunpack.c.l.b16 %v628
      %v666 = vunpack.c.l.b16 %v629
      %v667 = vunpack.c.l.b16 %v630
      %v668 = vunpack.c.l.b16 %v631
      %v669 = vunpack.c.l.b16 %v632
      %v670 = vunpack.c.l.b16 %v633
      %v671 = vunpack.c.l.b16 %v634
      %v672 = vunpack.c.l.b16 %v635
      %v673 = vunpack.c.l.b16 %v636
      %v674 = vpack.c.b16 %v659, %v658
      %v675 = vpack.c.b16 %v661, %v660
      %v676 = vpack.c.b16 %v663, %v662
      %v677 = vpack.c.b16 %v665, %v664
      %v678 = vpack.c.b16 %v667, %v666
      %v679 = vpack.c.b16 %v669, %v668
      %v680 = vpack.c.b16 %v671, %v670
      %v681 = vpack.c.b16 %v673, %v672
      %690 = vmatprep.subr.bf16.mxu0 0
      %691 = vmatpush1.bf16.msra.mxu0 %v674
      %692 = vmatprep.subr.bf16.mxu0 0
      %693 = vmatpush1.bf16.msra.mxu0 %v675
      %694 = vmatprep.subr.bf16.mxu0 0
      %695 = vmatpush1.bf16.msra.mxu0 %v676
      %696 = vmatprep.subr.bf16.mxu0 0
      %697 = vmatpush1.bf16.msra.mxu0 %v677
      %698 = vmatprep.subr.bf16.mxu0 0
      %699 = vmatpush1.bf16.msra.mxu0 %v678
      %700 = vmatprep.subr.bf16.mxu0 0
      %701 = vmatpush1.bf16.msra.mxu0 %v679
      %702 = vmatprep.subr.bf16.mxu0 0
      %703 = vmatpush1.bf16.msra.mxu0 %v680
      %704 = vmatprep.subr.bf16.mxu0 0
      %705 = vmatpush1.bf16.msra.mxu0 %v681
      %706 = vmatprep.subr.bf16.mxu0 0
      %707 = vmatpush1.bf16.msra.mxu0 0
      %708 = vmatprep.subr.bf16.mxu0 0
      %709 = vmatpush1.bf16.msra.mxu0 0
      %710 = vmatprep.subr.bf16.mxu0 0
      %711 = vmatpush1.bf16.msra.mxu0 0
      %712 = vmatprep.subr.bf16.mxu0 0
      %713 = vmatpush1.bf16.msra.mxu0 0
      %714 = vmatprep.subr.bf16.mxu0 0
      %715 = vmatpush1.bf16.msra.mxu0 0
      %716 = vmatprep.subr.bf16.mxu0 0
      %717 = vmatpush1.bf16.msra.mxu0 0
      %718 = vmatprep.subr.bf16.mxu0 0
      %719 = vmatpush1.bf16.msra.mxu0 0
      %720 = vmatprep.subr.bf16.mxu0 0
      %721 = vmatpush1.bf16.msra.mxu0 0
      %722 = vmatprep.mubr.bf16.mxu0 0
      %723 = vmatmul.mubr.bf16.gmra.mrb[0].mxu0 %v620
      %v724 = vpop.f32.mrb[0].mxu0
      %v725 = vadd.f32 %v641, %v724
      %v726 = vpop.f32.mrb[0].mxu0
      %v727 = vpop.f32.mrb[0].mxu0
      %v728 = vpop.f32.mrb[0].mxu0
      %729 = vdwg.mxu0
      %vm730 = vcmp.ge.f32.partialorder %v725, 0.0
      %v731 = vmul.f32 %v725, 0.01
      %v732 = vsel %vm730, %v725, %v731
      %v733 = vpack.c.bf16 %v732, %v732
      %v734 = vld [vmem:[%s3 + $0x48] sm:$0xf]
      %v735 = vld [vmem:[%s3 + $0x4c] sm:$0xf]
      %v736 = vld [vmem:[%s3 + $0x50] sm:$0xf]
      %v737 = vld [vmem:[%s3 + $0x54] sm:$0xf]
      %v738 = vld [vmem:[%s3 + $0x58] sm:$0xf]
      %v739 = vld [vmem:[%s3 + $0x5c] sm:$0xf]
      %v740 = vld [vmem:[%s3 + $0x60] sm:$0xf]
      %v741 = vld [vmem:[%s3 + $0x64] sm:$0xf]
      %v742 = vld [vmem:[%s3 + $0x68] sm:$0xf]
      %v743 = vld [vmem:[%s3 + $0x6c] sm:$0xf]
      %v744 = vld [vmem:[%s3 + $0x70] sm:$0xf]
      %v745 = vld [vmem:[%s3 + $0x74] sm:$0xf]
      %v746 = vld [vmem:[%s3 + $0x78] sm:$0xf]
      %v747 = vld [vmem:[%s3 + $0x7c] sm:$0xf]
      %v748 = vld [vmem:[%s3 + $0x80] sm:$0xf]
      %v749 = vld [vmem:[%s3 + $0x84] sm:$0xf]
      %v750 = vld [vmem:[%s4 + $0x10] sm:$0x1]
      %v751 = vlaneseq
      %v752 = vshrl.u32 %v751, 7
      %v753 = vsub.s32 0, %v752
      %v754 = vrot.slane %v750, %v753
      %v771 = vunpack.c.l.b16 %v734
      %v772 = vunpack.c.l.b16 %v735
      %v773 = vunpack.c.l.b16 %v736
      %v774 = vunpack.c.l.b16 %v737
      %v775 = vunpack.c.l.b16 %v738
      %v776 = vunpack.c.l.b16 %v739
      %v777 = vunpack.c.l.b16 %v740
      %v778 = vunpack.c.l.b16 %v741
      %v779 = vunpack.c.l.b16 %v742
      %v780 = vunpack.c.l.b16 %v743
      %v781 = vunpack.c.l.b16 %v744
      %v782 = vunpack.c.l.b16 %v745
      %v783 = vunpack.c.l.b16 %v746
      %v784 = vunpack.c.l.b16 %v747
      %v785 = vunpack.c.l.b16 %v748
      %v786 = vunpack.c.l.b16 %v749
      %v787 = vpack.c.b16 %v772, %v771
      %v788 = vpack.c.b16 %v774, %v773
      %v789 = vpack.c.b16 %v776, %v775
      %v790 = vpack.c.b16 %v778, %v777
      %v791 = vpack.c.b16 %v780, %v779
      %v792 = vpack.c.b16 %v782, %v781
      %v793 = vpack.c.b16 %v784, %v783
      %v794 = vpack.c.b16 %v786, %v785
      %803 = vmatprep.subr.bf16.mxu0 0
      %804 = vmatpush1.bf16.msra.mxu0 %v787
      %805 = vmatprep.subr.bf16.mxu0 0
      %806 = vmatpush1.bf16.msra.mxu0 %v788
      %807 = vmatprep.subr.bf16.mxu0 0
      %808 = vmatpush1.bf16.msra.mxu0 %v789
      %809 = vmatprep.subr.bf16.mxu0 0
      %810 = vmatpush1.bf16.msra.mxu0 %v790
      %811 = vmatprep.subr.bf16.mxu0 0
      %812 = vmatpush1.bf16.msra.mxu0 %v791
      %813 = vmatprep.subr.bf16.mxu0 0
      %814 = vmatpush1.bf16.msra.mxu0 %v792
      %815 = vmatprep.subr.bf16.mxu0 0
      %816 = vmatpush1.bf16.msra.mxu0 %v793
      %817 = vmatprep.subr.bf16.mxu0 0
      %818 = vmatpush1.bf16.msra.mxu0 %v794
      %819 = vmatprep.subr.bf16.mxu0 0
      %820 = vmatpush1.bf16.msra.mxu0 0
      %821 = vmatprep.subr.bf16.mxu0 0
      %822 = vmatpush1.bf16.msra.mxu0 0
      %823 = vmatprep.subr.bf16.mxu0 0
      %824 = vmatpush1.bf16.msra.mxu0 0
      %825 = vmatprep.subr.bf16.mxu0 0
      %826 = vmatpush1.bf16.msra.mxu0 0
      %827 = vmatprep.subr.bf16.mxu0 0
      %828 = vmatpush1.bf16.msra.mxu0 0
      %829 = vmatprep.subr.bf16.mxu0 0
      %830 = vmatpush1.bf16.msra.mxu0 0
      %831 = vmatprep.subr.bf16.mxu0 0
      %832 = vmatpush1.bf16.msra.mxu0 0
      %833 = vmatprep.subr.bf16.mxu0 0
      %834 = vmatpush1.bf16.msra.mxu0 0
      %835 = vmatprep.mubr.bf16.mxu0 0
      %836 = vmatmul.mubr.bf16.gmra.mrb[0].mxu0 %v733
      %v837 = vpop.f32.mrb[0].mxu0
      %v838 = vadd.f32 %v754, %v837
      %v839 = vpop.f32.mrb[0].mxu0
      %v840 = vpop.f32.mrb[0].mxu0
      %v841 = vpop.f32.mrb[0].mxu0
      %842 = vdwg.mxu0
      %v843 = vmax.f32 %v838, 0.0
      %v844 = vpack.c.bf16 %v843, %v843
      %v845 = vld [vmem:[%s3 + $0x88] sm:$0xf]
      %v846 = vld [vmem:[%s3 + $0x8c] sm:$0xf]
      %v847 = vld [vmem:[%s3 + $0x90] sm:$0xf]
      %v848 = vld [vmem:[%s3 + $0x94] sm:$0xf]
      %v849 = vld [vmem:[%s3 + $0x98] sm:$0xf]
      %v850 = vld [vmem:[%s3 + $0x9c] sm:$0xf]
      %v851 = vld [vmem:[%s3 + $0xa0] sm:$0xf]
      %v852 = vld [vmem:[%s3 + $0xa4] sm:$0xf]
      %v853 = vld [vmem:[%s3 + $0xa8] sm:$0xf]
      %v854 = vld [vmem:[%s3 + $0xac] sm:$0xf]
      %v855 = vld [vmem:[%s3 + $0xb0] sm:$0xf]
      %v856 = vld [vmem:[%s3 + $0xb4] sm:$0xf]
      %v857 = vld [vmem:[%s3 + $0xb8] sm:$0xf]
      %v858 = vld [vmem:[%s3 + $0xbc] sm:$0xf]
      %v859 = vld [vmem:[%s3 + $0xc0] sm:$0xf]
      %v860 = vld [vmem:[%s3 + $0xc4] sm:$0xf]
      %v861 = vld [vmem:[%s4 + $0x18] sm:$0x1]
      %v862 = vlaneseq
      %v863 = vshrl.u32 %v862, 7
      %v864 = vsub.s32 0, %v863
      %v865 = vrot.slane %v861, %v864
      %v882 = vunpack.c.l.b16 %v845
      %v883 = vunpack.c.l.b16 %v846
      %v884 = vunpack.c.l.b16 %v847
      %v885 = vunpack.c.l.b16 %v848
      %v886 = vunpack.c.l.b16 %v849
      %v887 = vunpack.c.l.b16 %v850
      %v888 = vunpack.c.l.b16 %v851
      %v889 = vunpack.c.l.b16 %v852
      %v890 = vunpack.c.l.b16 %v853
      %v891 = vunpack.c.l.b16 %v854
      %v892 = vunpack.c.l.b16 %v855
      %v893 = vunpack.c.l.b16 %v856
      %v894 = vunpack.c.l.b16 %v857
      %v895 = vunpack.c.l.b16 %v858
      %v896 = vunpack.c.l.b16 %v859
      %v897 = vunpack.c.l.b16 %v860
      %v898 = vpack.c.b16 %v883, %v882
      %v899 = vpack.c.b16 %v885, %v884
      %v900 = vpack.c.b16 %v887, %v886
      %v901 = vpack.c.b16 %v889, %v888
      %v902 = vpack.c.b16 %v891, %v890
      %v903 = vpack.c.b16 %v893, %v892
      %v904 = vpack.c.b16 %v895, %v894
      %v905 = vpack.c.b16 %v897, %v896
      %914 = vmatprep.subr.bf16.mxu0 0
      %915 = vmatpush1.bf16.msra.mxu0 %v898
      %916 = vmatprep.subr.bf16.mxu0 0
      %917 = vmatpush1.bf16.msra.mxu0 %v899
      %918 = vmatprep.subr.bf16.mxu0 0
      %919 = vmatpush1.bf16.msra.mxu0 %v900
      %920 = vmatprep.subr.bf16.mxu0 0
      %921 = vmatpush1.bf16.msra.mxu0 %v901
      %922 = vmatprep.subr.bf16.mxu0 0
      %923 = vmatpush1.bf16.msra.mxu0 %v902
      %924 = vmatprep.subr.bf16.mxu0 0
      %925 = vmatpush1.bf16.msra.mxu0 %v903
      %926 = vmatprep.subr.bf16.mxu0 0
      %927 = vmatpush1.bf16.msra.mxu0 %v904
      %928 = vmatprep.subr.bf16.mxu0 0
      %929 = vmatpush1.bf16.msra.mxu0 %v905
      %930 = vmatprep.subr.bf16.mxu0 0
      %931 = vmatpush1.bf16.msra.mxu0 0
      %932 = vmatprep.subr.bf16.mxu0 0
      %933 = vmatpush1.bf16.msra.mxu0 0
      %934 = vmatprep.subr.bf16.mxu0 0
      %935 = vmatpush1.bf16.msra.mxu0 0
      %936 = vmatprep.subr.bf16.mxu0 0
      %937 = vmatpush1.bf16.msra.mxu0 0
      %938 = vmatprep.subr.bf16.mxu0 0
      %939 = vmatpush1.bf16.msra.mxu0 0
      %940 = vmatprep.subr.bf16.mxu0 0
      %941 = vmatpush1.bf16.msra.mxu0 0
      %942 = vmatprep.subr.bf16.mxu0 0
      %943 = vmatpush1.bf16.msra.mxu0 0
      %944 = vmatprep.subr.bf16.mxu0 0
      %945 = vmatpush1.bf16.msra.mxu0 0
      %946 = vmatprep.mubr.bf16.mxu0 0
      %947 = vmatmul.mubr.bf16.gmra.mrb[0].mxu0 %v844
      %v948 = vpop.f32.mrb[0].mxu0
      %v949 = vadd.f32 %v865, %v948
      %v950 = vpop.f32.mrb[0].mxu0
      %v951 = vpop.f32.mrb[0].mxu0
      %v952 = vpop.f32.mrb[0].mxu0
      %953 = vdwg.mxu0
      %v954 = vxor.u32 %v949, 2147483648
      %v955 = vmul.f32 %v954, 1.442695
      %v956 = vpow.pop %v955
      %v957 = vadd.f32 %v956, 1.0
      %v958 = vrcp.pop %v957
      %v959 = vmul.f32 1.0, %v958
      %961 = vrot.lane.b32.xlu0 %v959, 9
      %v962 = vpop.permute.xlu0 %961
      %v964 = vsel %vm557, %v556, %v962
      %vm965 = vcmask 80896
      %966 = vst.msk [vmem:[%s219] sm:$0xff] %vm965, %v964
      %p967 = scmp.lt.s32.totalorder %s16, 1
      %s968 = scalar_select %p967, %s16, 1
      %s969 = smul.addr %s968, 8
      %s970 = scalar_lea.vmem %s5, %s969
      // Predicated region
      $region41: #{netclassif_forward.1} parent=39 // pred_check
        %p971 = pneg %p144
      $region42: #{netclassif_forward.1} parent=39 // pred_check_branch
        %973 = sbr.rel (%p971) target = $region44
      $region43: #{netclassif_forward.1} parent=39 // pred_region
        _
      $region44: #{netclassif_forward.1} parent=39 // pred_fallthru
        _
    $region40: #{netclassif_forward.1} parent=5 // pred_fallthru
      _
    %p974 = scmp.le.s32.totalorder 2, %s11
    // Predicated region
    $region45: #{netclassif_forward.1} parent=5 // pred_check
      %p975 = pneg %p974
    $region46: #{netclassif_forward.1} parent=5 // pred_check_branch
      %977 = sbr.rel (%p975) target = $region48
    $region47: #{netclassif_forward.1} parent=5 // pred_region
      %s978 = ssub.s32 %s11, 2
      // Predicated region
      $region49: #{netclassif_forward.1} parent=47 // pred_check
        %p979 = pneg %p150
      $region50: #{netclassif_forward.1} parent=47 // pred_check_branch
        %981 = sbr.rel (%p979) target = $region52
      $region51: #{netclassif_forward.1} parent=47 // pred_region
        %p982 = scmp.lt.s32.totalorder %s17, 1
        %s983 = scalar_select %p982, %s17, 1
        %s984 = smul.addr %s983, 8
        %s985 = scalar_lea.vmem %s5, %s984
      $region52: #{netclassif_forward.1} parent=47 // pred_fallthru
        _
    $region48: #{netclassif_forward.1} parent=5 // pred_fallthru
      _
  $region6: #{netclassif_forward.1} parent=0 // loop_footer
    %s15 = sadd.s32 1, %s11
  $region7: #{netclassif_forward.1} parent=0 // loop_footer_branch
    %10 = sbr.rel target = $region3
  $region8: #{netclassif_forward.1} parent=0 // loop_exit
    _

</llo_original>
